<compile_context>
chip_gen: v7x
topology: tpu7x:2x2x1
jax: 0.10.0
libtpu: 0.0.40
codegen_flags: <defaults>
</compile_context>

<pallas_src>
import math

import jax
import jax.numpy as jnp
from jax.experimental import pallas as pl
from jax.experimental.pallas import tpu as pltpu

MAGIC_CONSTANT = math.sqrt(2.0 / math.pi)

_LANES = 512                            # slab width for the generic path
_TARGET_BLOCK_BYTES = 2 * 1024 * 1024   # ~2 MiB per buffer block


def _gelu_kernel(x_ref, o_ref):
    xf = x_ref[...].astype(jnp.float32)
    inner = MAGIC_CONSTANT * (xf + 0.044715 * (xf * xf * xf))
    o_ref[...] = (0.5 * xf * (1.0 + jnp.tanh(inner))).astype(o_ref.dtype)


def _sublane_granularity(dtype) -> int:
    itemsize = jnp.dtype(dtype).itemsize
    return {4: 8, 2: 16, 1: 32}.get(itemsize, 8)


def _round_up(v: int, m: int) -> int:
    return ((v + m - 1) // m) * m


def _launch(x2d: jax.Array, br: int, bc: int) -> jax.Array:
    rows, cols = x2d.shape
    grid = (pl.cdiv(rows, br), pl.cdiv(cols, bc))
    return pl.pallas_call(
        _gelu_kernel,
        out_shape=jax.ShapeDtypeStruct((rows, cols), x2d.dtype),
        grid_spec=pltpu.PrefetchScalarGridSpec(
            num_scalar_prefetch=0,
            grid=grid,
            in_specs=[pl.BlockSpec((br, bc), lambda i, j: (i, j))],
            out_specs=pl.BlockSpec((br, bc), lambda i, j: (i, j)),
        ),
        compiler_params=pltpu.CompilerParams(
            dimension_semantics=("parallel", "parallel"),
        ),
    )(x2d)


def google_gelu(x: jax.Array) -> jax.Array:
    """Elementwise tanh-GELU. Accepts any shape/dtype; layout-agnostic."""
    orig_shape = x.shape
    dtype = x.dtype
    itemsize = jnp.dtype(dtype).itemsize
    sublane = _sublane_granularity(dtype)

    total = math.prod(orig_shape) if orig_shape else 1
    if total == 0:
        return x
    last = orig_shape[-1] if orig_shape else 1

    if len(orig_shape) >= 2 and last % 128 == 0:
        # Fast path: already lane-dense; no padding, no relayout.
        rows = total // last
        bc = min(last, 2048)                                    # multiple of 128
        br = max(sublane, _TARGET_BLOCK_BYTES // (bc * itemsize))
        br = min(_round_up(br, sublane), _round_up(rows, sublane))
        out2d = _launch(x.reshape(rows, last), br, bc)
        return out2d.reshape(orig_shape)

    # Generic path: lane-dense (rows, 512) slab; pad only to the lane multiple.
    x_flat = x.reshape(-1)
    padded_total = _round_up(total, _LANES)
    if padded_total != total:
        # GELU(0) == 0 and the pad region is sliced off anyway.
        x_flat = jnp.pad(x_flat, (0, padded_total - total))
    rows = padded_total // _LANES
    br = max(sublane, _TARGET_BLOCK_BYTES // (_LANES * itemsize))
    br = min(_round_up(br, sublane), _round_up(rows, sublane))
    out2d = _launch(x_flat.reshape(rows, _LANES), br, _LANES)
    out_flat = out2d.reshape(-1)
    if padded_total != total:
        out_flat = out_flat[:total]
    return out_flat.reshape(orig_shape)


def _reference_gelu(x):
    xf = x.astype(jnp.float32)
    return (0.5 * xf * (1.0 + jnp.tanh(MAGIC_CONSTANT * (xf + 0.044715 * xf ** 3)))
            ).astype(x.dtype)


if __name__ == "__main__":
    key = jax.random.PRNGKey(0)

    # (batch, seq, hidden) = (2, 8, 32): hidden < 128 -> generic slab path.
    x = jax.random.normal(key, (2, 8, 32), dtype=jnp.float32)
    y = google_gelu(x)
    jax.block_until_ready(y)
    y_ref = _reference_gelu(x)
    assert y.shape == x.shape and y.dtype == x.dtype
    assert jnp.allclose(y, y_ref, atol=1e-5, rtol=1e-5), "f32 mismatch vs reference"

    # bf16, hidden = 128 -> lane-dense fast path (no padding, no relayout).
    xb = jax.random.normal(jax.random.PRNGKey(1), (4, 16, 128), dtype=jnp.bfloat16)
    yb = google_gelu(xb)
    jax.block_until_ready(yb)
    yb_ref = _reference_gelu(xb)
    assert yb.shape == xb.shape and yb.dtype == xb.dtype
    assert jnp.allclose(yb.astype(jnp.float32), yb_ref.astype(jnp.float32),
                        atol=2e-2, rtol=2e-2), "bf16 mismatch vs reference"

    # Odd shape -> exercises pad + ragged (masked) edge blocks.
    xr = jax.random.normal(jax.random.PRNGKey(2), (3, 7, 48), dtype=jnp.float32)
    yr = google_gelu(xr)
    jax.block_until_ready(yr)
    yr_ref = _reference_gelu(xr)
    assert yr.shape == xr.shape and yr.dtype == xr.dtype
    assert jnp.allclose(yr, yr_ref, atol=1e-5, rtol=1e-5), "ragged mismatch vs reference"

    print("KERNEL_OK")
</pallas_src>

<mosaic_0001>
module attributes {stable_mosaic.version = 11 : i64} {
  func.func @_gelu_kernel(%arg0: i32, %arg1: i32, %arg2: memref<8x512xf32, #tpu.memory_space<vmem>>, %arg3: memref<8x512xf32, #tpu.memory_space<vmem>>) attributes {dimension_semantics = [#tpu.dimension_semantics<parallel>, #tpu.dimension_semantics<parallel>], iteration_bounds = array<i64: 1, 1>, scalar_prefetch = 0 : i64, scratch_operands = 0 : i64, tpu.core_type = #tpu.core_type<tc>, window_params = [{transform_indices = @transform_0, window_bounds = array<i64: 8, 512>}, {transform_indices = @transform_1, window_bounds = array<i64: 8, 512>}]} {
    %c0 = arith.constant 0 : index
    %c0_0 = arith.constant 0 : index
    %0 = vector.load %arg2[%c0, %c0_0] : memref<8x512xf32, #tpu.memory_space<vmem>>, vector<8x512xf32>
    %1 = arith.mulf %0, %0 : vector<8x512xf32>
    %2 = arith.mulf %1, %0 : vector<8x512xf32>
    %cst = arith.constant 4.471500e-02 : f32
    %3 = vector.broadcast %cst : f32 to vector<8x512xf32>
    %4 = arith.mulf %3, %2 : vector<8x512xf32>
    %5 = arith.addf %0, %4 : vector<8x512xf32>
    %cst_1 = arith.constant 0.797884583 : f32
    %6 = vector.broadcast %cst_1 : f32 to vector<8x512xf32>
    %7 = arith.mulf %6, %5 : vector<8x512xf32>
    %cst_2 = arith.constant 5.000000e-01 : f32
    %8 = vector.broadcast %cst_2 : f32 to vector<8x512xf32>
    %9 = arith.mulf %8, %0 : vector<8x512xf32>
    %10 = math.tanh %7 : vector<8x512xf32>
    %cst_3 = arith.constant 1.000000e+00 : f32
    %11 = vector.broadcast %cst_3 : f32 to vector<8x512xf32>
    %12 = arith.addf %11, %10 : vector<8x512xf32>
    %13 = arith.mulf %9, %12 : vector<8x512xf32>
    %c0_4 = arith.constant 0 : index
    %c0_5 = arith.constant 0 : index
    %14 = vector.load %arg3[%c0_4, %c0_5] : memref<8x512xf32, #tpu.memory_space<vmem>>, vector<8x512xf32>
    tpu.vector_store %arg3[%c0_4, %c0_5], %13 {strides = array<i32>} : memref<8x512xf32, #tpu.memory_space<vmem>>, vector<8x512xf32>,
    return
  }
  func.func @transform_0(%arg0: i32, %arg1: i32) -> (i32, i32) {
    %c0_i32 = arith.constant 0 : i32
    return %arg0, %arg1 : i32, i32
  }
  func.func @transform_1(%arg0: i32, %arg1: i32) -> (i32, i32) {
    %c0_i32 = arith.constant 0 : i32
    return %arg0, %arg1 : i32, i32
  }
}

</mosaic_0001>

<llo_original>
// kernel: tpu_custom_call.1
$region0: #{tpu_custom_call.1}
  #allocation0 [shape = 'u32[]', space=smem, size = 0x4, offset = 0x4, fixed_abs, tag = 'smem constant byte address 0x4 - core index']
  #allocation1 [shape = 'u32[144,128]{1,0:T(1,128)}', space=vmem, size = 0x12000, scoped, tag = 'internal scratch']
  %s0 = inlined_call_operand.hbm [shape: f32[1,512], index: 0, kind: input, shape index: {}]
  %s1 = inlined_call_operand.hbm [shape: f32[1,512], index: 1, kind: output, shape index: {}]
  %s2 = sld [smem:[#allocation0]]
  $region18: #{tpu_custom_call.1} parent=0
    _
  %s4 = ssub.s32 1, %s2
  %s5 = scalar_select 0, %s4, %s2
  $region1: #{tpu_custom_call.1} parent=0
    #allocation2 [shape = 'u8[16384]{0}', space=vmem, size = 0x4000, scoped, tag = 'input window, operand 0, single buffered']
    #allocation3 [shape = 's32[1]{0}', space=sflag, size = 0x4, scoped, tag = 'scoped memory for tpu_custom_call.1']
    #allocation4 [shape = 's32[1]{0}', space=sflag, size = 0x4, scoped, tag = 'scoped memory for tpu_custom_call.1']
    #allocation5 [shape = 'u8[16384]{0}', space=vmem, size = 0x4000, scoped, tag = 'output window, operand 0, single buffered']
    %6 = vsyncpa [#allocation3], 0
    %7 = vsyncpa [#allocation4], 0
    // Predicated region
    $region2: #{tpu_custom_call.1} parent=1 // pred_check
      _
    $region3: #{tpu_custom_call.1} parent=1 // pred_check_branch
      %9 = sbr.rel (0) target = $region5
    $region4: #{tpu_custom_call.1} parent=1 // pred_region
      %s11 = ssub.s32 512, 64
      %12 = vsyncadd [#allocation3], %s11
      %s13 = sshll.u32 [#allocation2], 4
      %s14 = int_to_ptr.vmem [resolvable:$true] %s13
      %19 = dma.hbm_to_vmem [thread:$0]  %s0, 64, %s14, [#allocation3], 64, 64, 4
    $region5: #{tpu_custom_call.1} parent=1 // pred_fallthru
      _
    // Predicated region
    $region6: #{tpu_custom_call.1} parent=1 // pred_check
      _
    $region7: #{tpu_custom_call.1} parent=1 // pred_check_branch
      %21 = sbr.rel (0) target = $region9
    $region8: #{tpu_custom_call.1} parent=1 // pred_region
      %22 = dma.done [#allocation3], 512
    $region9: #{tpu_custom_call.1} parent=1 // pred_fallthru
      _
    %v23 = vld [vmem:[#allocation2] sm:$0xf]
    %v24 = vld [vmem:[#allocation2 + $0x4] sm:$0xf]
    %v25 = vld [vmem:[#allocation2 + $0x8] sm:$0xf]
    %v26 = vld [vmem:[#allocation2 + $0xc] sm:$0xf]
    %v27 = vld [vmem:[#allocation2 + $0x10] sm:$0xf]
    %v28 = vld [vmem:[#allocation2 + $0x14] sm:$0xf]
    %v29 = vld [vmem:[#allocation2 + $0x18] sm:$0xf]
    %v30 = vld [vmem:[#allocation2 + $0x1c] sm:$0xf]
    %v31 = vmul.f32 %v23, %v23
    %v32 = vmul.f32 %v24, %v24
    %v33 = vmul.f32 %v25, %v25
    %v34 = vmul.f32 %v26, %v26
    %v35 = vmul.f32 %v27, %v27
    %v36 = vmul.f32 %v28, %v28
    %v37 = vmul.f32 %v29, %v29
    %v38 = vmul.f32 %v30, %v30
    %v39 = vmul.f32 %v31, %v23
    %v40 = vmul.f32 %v32, %v24
    %v41 = vmul.f32 %v33, %v25
    %v42 = vmul.f32 %v34, %v26
    %v43 = vmul.f32 %v35, %v27
    %v44 = vmul.f32 %v36, %v28
    %v45 = vmul.f32 %v37, %v29
    %v46 = vmul.f32 %v38, %v30
    %v47 = vmul.f32 %v39, 0.044715
    %v48 = vmul.f32 %v40, 0.044715
    %v49 = vmul.f32 %v41, 0.044715
    %v50 = vmul.f32 %v42, 0.044715
    %v51 = vmul.f32 %v43, 0.044715
    %v52 = vmul.f32 %v44, 0.044715
    %v53 = vmul.f32 %v45, 0.044715
    %v54 = vmul.f32 %v46, 0.044715
    %v55 = vadd.f32 %v23, %v47
    %v56 = vadd.f32 %v24, %v48
    %v57 = vadd.f32 %v25, %v49
    %v58 = vadd.f32 %v26, %v50
    %v59 = vadd.f32 %v27, %v51
    %v60 = vadd.f32 %v28, %v52
    %v61 = vadd.f32 %v29, %v53
    %v62 = vadd.f32 %v30, %v54
    %v63 = vmul.f32 %v55, 0.7978846
    %v64 = vmul.f32 %v56, 0.7978846
    %v65 = vmul.f32 %v57, 0.7978846
    %v66 = vmul.f32 %v58, 0.7978846
    %v67 = vmul.f32 %v59, 0.7978846
    %v68 = vmul.f32 %v60, 0.7978846
    %v69 = vmul.f32 %v61, 0.7978846
    %v70 = vmul.f32 %v62, 0.7978846
    %v71 = vmul.f32 %v23, 0.5
    %v72 = vmul.f32 %v24, 0.5
    %v73 = vmul.f32 %v25, 0.5
    %v74 = vmul.f32 %v26, 0.5
    %v75 = vmul.f32 %v27, 0.5
    %v76 = vmul.f32 %v28, 0.5
    %v77 = vmul.f32 %v29, 0.5
    %v78 = vmul.f32 %v30, 0.5
    %v79 = vtanh.pop %v63
    %v80 = vtanh.pop %v64
    %v81 = vtanh.pop %v65
    %v82 = vtanh.pop %v66
    %v83 = vtanh.pop %v67
    %v84 = vtanh.pop %v68
    %v85 = vtanh.pop %v69
    %v86 = vtanh.pop %v70
    %v87 = vadd.f32 %v79, 1.0
    %v88 = vadd.f32 %v80, 1.0
    %v89 = vadd.f32 %v81, 1.0
    %v90 = vadd.f32 %v82, 1.0
    %v91 = vadd.f32 %v83, 1.0
    %v92 = vadd.f32 %v84, 1.0
    %v93 = vadd.f32 %v85, 1.0
    %v94 = vadd.f32 %v86, 1.0
    %v95 = vmul.f32 %v71, %v87
    %v96 = vmul.f32 %v72, %v88
    %v97 = vmul.f32 %v73, %v89
    %v98 = vmul.f32 %v74, %v90
    %v99 = vmul.f32 %v75, %v91
    %v100 = vmul.f32 %v76, %v92
    %v101 = vmul.f32 %v77, %v93
    %v102 = vmul.f32 %v78, %v94
    %v103 = vlaneseq
    %vm104 = vcmp.ge.s32.totalorder %v103, 0
    %vm105 = vcmp.lt.s32.totalorder %v103, 512
    %vm106 = vmand %vm104, %vm105
    %107 = vst.msk [vmem:[#allocation5] sm:$0xf] %vm106, %v95
    %108 = vst.msk [vmem:[#allocation5 + $0x4] sm:$0xf] %vm106, %v96
    %109 = vst.msk [vmem:[#allocation5 + $0x8] sm:$0xf] %vm106, %v97
    %110 = vst.msk [vmem:[#allocation5 + $0xc] sm:$0xf] %vm106, %v98
    %111 = vst.msk [vmem:[#allocation5 + $0x10] sm:$0xf] %vm106, %v99
    %112 = vst.msk [vmem:[#allocation5 + $0x14] sm:$0xf] %vm106, %v100
    %113 = vst.msk [vmem:[#allocation5 + $0x18] sm:$0xf] %vm106, %v101
    %114 = vst.msk [vmem:[#allocation5 + $0x1c] sm:$0xf] %vm106, %v102
    // Predicated region
    $region10: #{tpu_custom_call.1} parent=1 // pred_check
      _
    $region11: #{tpu_custom_call.1} parent=1 // pred_check_branch
      %116 = sbr.rel (0) target = $region13
    $region12: #{tpu_custom_call.1} parent=1 // pred_region
      %s118 = ssub.s32 512, 64
      %119 = vsyncadd [#allocation4], %s118
      %s120 = sshll.u32 [#allocation5], 4
      %s121 = int_to_ptr.vmem [resolvable:$true] %s120
      %126 = dma.vmem_to_hbm [thread:$0]  %s121, 64, %s1, [#allocation4], 64, 64, 4
    $region13: #{tpu_custom_call.1} parent=1 // pred_fallthru
      _
    // Predicated region
    $region14: #{tpu_custom_call.1} parent=1 // pred_check
      _
    $region15: #{tpu_custom_call.1} parent=1 // pred_check_branch
      %128 = sbr.rel (0) target = $region17
    $region16: #{tpu_custom_call.1} parent=1 // pred_region
      %129 = dma.done [#allocation4], 512
    $region17: #{tpu_custom_call.1} parent=1 // pred_fallthru
      _
    %130 = vsyncpa [#allocation3], 1
    %131 = vsyncpa [#allocation4], 1

</llo_original>
